<compile_context>
chip_gen: v7x
topology: tpu7x:2x2x1
jax: 0.10.0
libtpu: 0.0.40
codegen_flags: <defaults>
</compile_context>

<pallas_src>
import numpy as np
import jax
import jax.numpy as jnp
from jax import lax
from jax.experimental import pallas as pl
from jax.experimental.pallas import tpu as pltpu


_MAX_TOKEN_TILE = 256
_VOCAB_CHUNKS = (4096, 2048, 1024, 512, 256, 128, 64, 32, 16, 8)


def _round_up(x, m):
    return ((x + m - 1) // m) * m


def _vmem_caps():
    """Per-generation VMEM (budget, scoped-limit) in bytes."""
    try:
        cap = int(pltpu.get_tpu_info().vmem_capacity_bytes)
    except Exception:
        cap = 64 * 1024 * 1024  # conservative: v7x per-TC VMEM
    budget = (cap * 3) // 4                       # ~48 MiB v7x, ~96 MiB v5e/v6e
    limit = min((cap * 85) // 100, cap - (4 << 20))
    return budget, limit


def _embed_kernel(idx_ref, table_ref, out_ref):
    """out_tile += one_hot(ids - vocab_offset) @ table_chunk   (MXU gather).

    idx_ref:   VMEM int32 (t_tile, 1)   flat token ids for this token tile
    table_ref: VMEM f32   (v_tile, D)   current vocab chunk of the table
    out_ref:   VMEM f32   (t_tile, D)   output tile, accumulated over vocab axis
    """
    j = pl.program_id(1)  # vocab-chunk index (reduction axis)

    @pl.when(j == 0)
    def _init():
        out_ref[...] = jnp.zeros_like(out_ref)

    t_tile = idx_ref.shape[0]
    v_tile = table_ref.shape[0]

    local_ids = idx_ref[...] - j * v_tile                         # (t_tile, 1)
    lane_iota = lax.broadcasted_iota(jnp.int32, (t_tile, v_tile), 1)
    one_hot = (lane_iota == local_ids).astype(jnp.float32)        # VPU compare

    # One-hot rows (exact 0.0/1.0) make the f32 MXU matmul an exact gather when
    # the f32 table is reconstructed via the multi-pass bf16 decomposition
    # (precision=HIGHEST); accumulation happens in f32.
    out_ref[...] += jnp.dot(
        one_hot,
        table_ref[...],
        preferred_element_type=jnp.float32,
        precision=lax.Precision.HIGHEST,
    )


def _make_table_spec(v_tile, d_pad, single_buffer):
    index_map = lambda i, j: (j, 0)
    if single_buffer:
        # Constant block across the whole grid -> no need to double-buffer it;
        # halves the table's VMEM footprint (biggest payoff on v7x's 64 MiB).
        try:
            return pl.BlockSpec((v_tile, d_pad), index_map,
                                pipeline_mode=pl.Buffered(1))
        except TypeError:  # older Pallas without the pipeline_mode kwarg
            pass
    return pl.BlockSpec((v_tile, d_pad), index_map)


def embedding_lookup(indices, embedding_matrix):
    """Gather rows of `embedding_matrix` at `indices` via a Pallas TPU kernel."""
    orig_shape = indices.shape
    vocab_size, emb_dim = embedding_matrix.shape
    budget, vmem_limit = _vmem_caps()

    # --- flatten / clamp token ids (PyTorch raises on OOB; we clamp) --------
    flat_idx = jnp.clip(indices.reshape(-1).astype(jnp.int32), 0, vocab_size - 1)
    n_tok = int(flat_idx.shape[0])

    # --- lane-dense output: pad embedding dim to a multiple of 128 ----------
    d_pad = _round_up(emb_dim, 128)

    # --- token tile: multiple of 8; shrink for very wide embeddings (v7x) ---
    t_tile = min(_MAX_TOKEN_TILE, _round_up(n_tok, 8))
    while t_tile > 8 and 2 * t_tile * d_pad * 4 > budget // 4:
        t_tile = _round_up(t_tile // 2, 8)
    n_pad = _round_up(n_tok, t_tile)

    # --- vocab chunk: whole table resident if it fits, else stream chunks ---
    # TODO(synk): for n_tok*D << V*D, add an HBM row-gather path (table in
    # pl.ANY + >=4 in-flight pltpu.make_async_copy slots) to avoid reading the
    # whole table at all on bandwidth-poor v5e/v6e.
    def _fits(v_rows, table_buffers):
        est = (table_buffers * v_rows * d_pad * 4   # table chunk(s)
               + 2 * t_tile * d_pad * 4             # double-buffered out tiles
               + 2 * t_tile * 4                     # idx tiles (tiny)
               + 3 * t_tile * v_rows * 4            # one-hot / iota temporaries
               + (2 << 20))                         # headroom
        return est <= budget

    v_full = _round_up(vocab_size, 8)
    if _fits(v_full, 1):
        v_tile, resident = v_full, True
    else:
        v_tile, resident = 8, False
        for v in _VOCAB_CHUNKS:
            if v < v_full and _fits(v, 2):
                v_tile = v
                break
    v_pad = _round_up(vocab_size, v_tile)

    # --- pad operands --------------------------------------------------------
    table = embedding_matrix.astype(jnp.float32)
    if (v_pad, d_pad) != (vocab_size, emb_dim):
        table = jnp.pad(table, ((0, v_pad - vocab_size), (0, d_pad - emb_dim)))
    if n_pad != n_tok:
        flat_idx = jnp.pad(flat_idx, (0, n_pad - n_tok))
    idx2d = flat_idx.reshape(n_pad, 1)

    n_tok_tiles = n_pad // t_tile
    n_voc_tiles = v_pad // v_tile
    grid = (n_tok_tiles, n_voc_tiles)

    # Few token tiles -> keep a single TensorCore (avoid duplicating the table
    # DMA on v7x megacore); vocab axis is a reduction -> "arbitrary".
    tok_sem = "parallel" if n_tok_tiles >= 8 else "arbitrary"

    table_reads = 1 if resident else n_tok_tiles
    cost = pl.CostEstimate(
        flops=2 * n_pad * v_pad * d_pad,
        transcendentals=0,
        bytes_accessed=(table_reads * v_pad * d_pad * 4
                        + n_pad * 4
                        + n_pad * d_pad * 4),
    )

    def _run(single_buffer):
        return pl.pallas_call(
            _embed_kernel,
            out_shape=jax.ShapeDtypeStruct((n_pad, d_pad), jnp.float32),
            grid=grid,
            in_specs=[
                pl.BlockSpec((t_tile, 1), lambda i, j: (i, 0)),
                _make_table_spec(v_tile, d_pad, single_buffer),
            ],
            out_specs=pl.BlockSpec((t_tile, d_pad), lambda i, j: (i, 0)),
            compiler_params=pltpu.CompilerParams(
                dimension_semantics=(tok_sem, "arbitrary"),
                vmem_limit_bytes=vmem_limit,
            ),
            cost_estimate=cost,
        )(idx2d, table)

    if n_voc_tiles == 1:
        try:
            out = _run(single_buffer=True)
        except Exception:
            out = _run(single_buffer=False)   # graceful fallback to default 2-buf
    else:
        out = _run(single_buffer=False)

    out = out[:n_tok, :emb_dim]
    return out.reshape(orig_shape + (emb_dim,))


class Embedding:
    """JAX/Pallas port of the PyTorch Embedding module."""

    def __init__(self, vocab_size, embedding_dim):
        np.random.seed(1)  # same deterministic init as the PyTorch module
        self.embedding_matrix = jnp.asarray(
            np.random.random(size=(vocab_size, embedding_dim)), dtype=jnp.float32
        )

    def __call__(self, input_x):
        return embedding_lookup(input_x, self.embedding_matrix)


if __name__ == "__main__":
    key = jax.random.PRNGKey(0)

    # --- main check: lane-aligned embedding dim ------------------------------
    vocab_size, embedding_dim = 64, 128
    batch, seq = 2, 8
    model = Embedding(vocab_size, embedding_dim)
    input_x = jax.random.randint(key, (batch, seq), 0, vocab_size, dtype=jnp.int32)

    out = jax.block_until_ready(model(input_x))
    ref = model.embedding_matrix[input_x, :]
    assert out.shape == (batch, seq, embedding_dim), out.shape
    # One-hot MXU gather under HIGHEST precision is expected bit-exact; allow
    # <= 1 f32 ulp of headroom (values are in [0, 1)).
    np.testing.assert_allclose(np.asarray(out), np.asarray(ref), rtol=0, atol=1e-7)

    # --- secondary check: exercises vocab/lane padding paths -----------------
    vocab2, dim2 = 50, 72
    model2 = Embedding(vocab2, dim2)
    key2 = jax.random.PRNGKey(0)
    input2 = jax.random.randint(key2, (2, 7), 0, vocab2, dtype=jnp.int32)
    out2 = jax.block_until_ready(model2(input2))
    ref2 = model2.embedding_matrix[input2, :]
    assert out2.shape == (2, 7, dim2), out2.shape
    np.testing.assert_allclose(np.asarray(out2), np.asarray(ref2), rtol=0, atol=1e-7)

    print("KERNEL_OK")
</pallas_src>

<mosaic_0001>
module attributes {stable_mosaic.version = 11 : i64} {
  func.func @_embed_kernel(%arg0: i32, %arg1: i32, %arg2: memref<16x1xi32, #tpu.memory_space<vmem>>, %arg3: memref<64x128xf32, #tpu.memory_space<vmem>>, %arg4: memref<16x128xf32, #tpu.memory_space<vmem>>) attributes {dimension_semantics = [#tpu.dimension_semantics<arbitrary>, #tpu.dimension_semantics<arbitrary>], iteration_bounds = array<i64: 1, 1>, scalar_prefetch = 0 : i64, scratch_operands = 0 : i64, tpu.core_type = #tpu.core_type<tc>, window_params = [{transform_indices = @transform_0, window_bounds = array<i64: 16, 1>}, {pipeline_mode = #tpu.pipeline_mode<synchronous>, transform_indices = @transform_1, window_bounds = array<i64: 64, 128>}, {transform_indices = @transform_2, window_bounds = array<i64: 16, 128>}]} {
    %c0_i32 = arith.constant 0 : i32
    %0 = arith.cmpi eq, %arg1, %c0_i32 : i32
    %1 = arith.extui %0 : i1 to i32
    %c0_i32_0 = arith.constant 0 : i32
    %2 = arith.cmpi ne, %1, %c0_i32_0 : i32
    scf.if %2 {
      %cst_8 = arith.constant 0.000000e+00 : f32
      %17 = vector.broadcast %cst_8 : f32 to vector<16x128xf32>
      %c0_9 = arith.constant 0 : index
      %c0_10 = arith.constant 0 : index
      %18 = vector.load %arg4[%c0_9, %c0_10] : memref<16x128xf32, #tpu.memory_space<vmem>>, vector<16x128xf32>
      tpu.vector_store %arg4[%c0_9, %c0_10], %17 {strides = array<i32>} : memref<16x128xf32, #tpu.memory_space<vmem>>, vector<16x128xf32>,
    } else {
    }
    %c0 = arith.constant 0 : index
    %c0_1 = arith.constant 0 : index
    %3 = vector.load %arg2[%c0, %c0_1] : memref<16x1xi32, #tpu.memory_space<vmem>>, vector<16x1xi32>
    %c64_i32 = arith.constant 64 : i32
    %4 = arith.muli %arg1, %c64_i32 : i32
    %5 = vector.broadcast %4 : i32 to vector<16x1xi32>
    %6 = arith.subi %3, %5 : vector<16x1xi32>
    %7 = tpu.iota {dimensions = array<i32: 1>} : vector<16x64xi32>
    %8 = vector.broadcast %6 : vector<16x1xi32> to vector<16x64xi32>
    %9 = arith.cmpi eq, %7, %8 : vector<16x64xi32>
    %10 = arith.extui %9 : vector<16x64xi1> to vector<16x64xi32>
    %11 = arith.sitofp %10 : vector<16x64xi32> to vector<16x64xf32>
    %c0_2 = arith.constant 0 : index
    %c0_3 = arith.constant 0 : index
    %12 = vector.load %arg4[%c0_2, %c0_3] : memref<16x128xf32, #tpu.memory_space<vmem>>, vector<16x128xf32>
    %c0_4 = arith.constant 0 : index
    %c0_5 = arith.constant 0 : index
    %13 = vector.load %arg3[%c0_4, %c0_5] : memref<64x128xf32, #tpu.memory_space<vmem>>, vector<64x128xf32>
    %cst = arith.constant dense<0.000000e+00> : vector<16x128xf32>
    %14 = tpu.matmul %11, %13, %cst {dimension_numbers = #tpu.dot_dimension_numbers<[1], [0], [0], [1], [0, 0, 1, 1], [], []>, precision = #tpu.contract_precision<fp32>} : vector<16x64xf32>, vector<64x128xf32>, vector<16x128xf32> -> vector<16x128xf32>
    %15 = arith.addf %12, %14 : vector<16x128xf32>
    %c0_6 = arith.constant 0 : index
    %c0_7 = arith.constant 0 : index
    %16 = vector.load %arg4[%c0_6, %c0_7] : memref<16x128xf32, #tpu.memory_space<vmem>>, vector<16x128xf32>
    tpu.vector_store %arg4[%c0_6, %c0_7], %15 {strides = array<i32>} : memref<16x128xf32, #tpu.memory_space<vmem>>, vector<16x128xf32>,
    return
  }
  func.func @transform_0(%arg0: i32, %arg1: i32) -> (i32, i32) {
    %c0_i32 = arith.constant 0 : i32
    %c0_i32_0 = arith.constant 0 : i32
    return %arg0, %c0_i32 : i32, i32
  }
  func.func @transform_1(%arg0: i32, %arg1: i32) -> (i32, i32) {
    %c0_i32 = arith.constant 0 : i32
    %c0_i32_0 = arith.constant 0 : i32
    return %arg1, %c0_i32 : i32, i32
  }
  func.func @transform_2(%arg0: i32, %arg1: i32) -> (i32, i32) {
    %c0_i32 = arith.constant 0 : i32
    %c0_i32_0 = arith.constant 0 : i32
    return %arg0, %c0_i32 : i32, i32
  }
}

module attributes {stable_mosaic.version = 11 : i64} {
  func.func @_embed_kernel(%arg0: i32, %arg1: i32, %arg2: memref<16x1xi32, #tpu.memory_space<vmem>>, %arg3: memref<64x128xf32, #tpu.memory_space<vmem>>, %arg4: memref<16x128xf32, #tpu.memory_space<vmem>>) attributes {dimension_semantics = [#tpu.dimension_semantics<arbitrary>, #tpu.dimension_semantics<arbitrary>], iteration_bounds = array<i64: 1, 1>, scalar_prefetch = 0 : i64, scratch_operands = 0 : i64, tpu.core_type = #tpu.core_type<tc>, window_params = [{transform_indices = @transform_0, window_bounds = array<i64: 16, 1>}, {transform_indices = @transform_1, window_bounds = array<i64: 64, 128>}, {transform_indices = @transform_2, window_bounds = array<i64: 16, 128>}]} {
    %c0_i32 = arith.constant 0 : i32
    %0 = arith.cmpi eq, %arg1, %c0_i32 : i32
    %1 = arith.extui %0 : i1 to i32
    %c0_i32_0 = arith.constant 0 : i32
    %2 = arith.cmpi ne, %1, %c0_i32_0 : i32
    scf.if %2 {
      %cst_8 = arith.constant 0.000000e+00 : f32
      %17 = vector.broadcast %cst_8 : f32 to vector<16x128xf32>
      %c0_9 = arith.constant 0 : index
      %c0_10 = arith.constant 0 : index
      %18 = vector.load %arg4[%c0_9, %c0_10] : memref<16x128xf32, #tpu.memory_space<vmem>>, vector<16x128xf32>
      tpu.vector_store %arg4[%c0_9, %c0_10], %17 {strides = array<i32>} : memref<16x128xf32, #tpu.memory_space<vmem>>, vector<16x128xf32>,
    } else {
    }
    %c0 = arith.constant 0 : index
    %c0_1 = arith.constant 0 : index
    %3 = vector.load %arg2[%c0, %c0_1] : memref<16x1xi32, #tpu.memory_space<vmem>>, vector<16x1xi32>
    %c64_i32 = arith.constant 64 : i32
    %4 = arith.muli %arg1, %c64_i32 : i32
    %5 = vector.broadcast %4 : i32 to vector<16x1xi32>
    %6 = arith.subi %3, %5 : vector<16x1xi32>
    %7 = tpu.iota {dimensions = array<i32: 1>} : vector<16x64xi32>
    %8 = vector.broadcast %6 : vector<16x1xi32> to vector<16x64xi32>
    %9 = arith.cmpi eq, %7, %8 : vector<16x64xi32>
    %10 = arith.extui %9 : vector<16x64xi1> to vector<16x64xi32>
    %11 = arith.sitofp %10 : vector<16x64xi32> to vector<16x64xf32>
    %c0_2 = arith.constant 0 : index
    %c0_3 = arith.constant 0 : index
    %12 = vector.load %arg4[%c0_2, %c0_3] : memref<16x128xf32, #tpu.memory_space<vmem>>, vector<16x128xf32>
    %c0_4 = arith.constant 0 : index
    %c0_5 = arith.constant 0 : index
    %13 = vector.load %arg3[%c0_4, %c0_5] : memref<64x128xf32, #tpu.memory_space<vmem>>, vector<64x128xf32>
    %cst = arith.constant dense<0.000000e+00> : vector<16x128xf32>
    %14 = tpu.matmul %11, %13, %cst {dimension_numbers = #tpu.dot_dimension_numbers<[1], [0], [0], [1], [0, 0, 1, 1], [], []>, precision = #tpu.contract_precision<fp32>} : vector<16x64xf32>, vector<64x128xf32>, vector<16x128xf32> -> vector<16x128xf32>
    %15 = arith.addf %12, %14 : vector<16x128xf32>
    %c0_6 = arith.constant 0 : index
    %c0_7 = arith.constant 0 : index
    %16 = vector.load %arg4[%c0_6, %c0_7] : memref<16x128xf32, #tpu.memory_space<vmem>>, vector<16x128xf32>
    tpu.vector_store %arg4[%c0_6, %c0_7], %15 {strides = array<i32>} : memref<16x128xf32, #tpu.memory_space<vmem>>, vector<16x128xf32>,
    return
  }
  func.func @transform_0(%arg0: i32, %arg1: i32) -> (i32, i32) {
    %c0_i32 = arith.constant 0 : i32
    %c0_i32_0 = arith.constant 0 : i32
    return %arg0, %c0_i32 : i32, i32
  }
  func.func @transform_1(%arg0: i32, %arg1: i32) -> (i32, i32) {
    %c0_i32 = arith.constant 0 : i32
    %c0_i32_0 = arith.constant 0 : i32
    return %arg1, %c0_i32 : i32, i32
  }
  func.func @transform_2(%arg0: i32, %arg1: i32) -> (i32, i32) {
    %c0_i32 = arith.constant 0 : i32
    %c0_i32_0 = arith.constant 0 : i32
    return %arg0, %c0_i32 : i32, i32
  }
}

</mosaic_0001>

<llo_original>
// kernel: tpu_custom_call.1
$region0: #{tpu_custom_call.1}
  #allocation0 [shape = 'u32[]', space=smem, size = 0x4, offset = 0x4, fixed_abs, tag = 'smem constant byte address 0x4 - core index']
  #allocation1 [shape = 'u32[144,128]{1,0:T(1,128)}', space=vmem, size = 0x12000, scoped, tag = 'internal scratch']
  %s0 = inlined_call_operand.vmem [shape: s32[16,1], index: 0, kind: input, shape index: {}]
  %s1 = inlined_call_operand.hbm [shape: f32[64,128], index: 1, kind: input, shape index: {}]
  %s2 = inlined_call_operand.hbm [shape: f32[16,128], index: 2, kind: output, shape index: {}]
  %s3 = sld [smem:[#allocation0]]
  $region26: #{tpu_custom_call.1} parent=0
    _
  %s5 = ssub.s32 1, %s3
  %s6 = scalar_select 0, %s5, %s3
  $region1: #{tpu_custom_call.1} parent=0
    #allocation2 [shape = 'u8[32768]{0}', space=vmem, size = 0x8000, scoped, tag = 'input window, operand 1, single buffered']
    #allocation3 [shape = 's32[1]{0}', space=sflag, size = 0x4, scoped, tag = 'scoped memory for tpu_custom_call.1']
    #allocation4 [shape = 's32[1]{0}', space=sflag, size = 0x4, scoped, tag = 'scoped memory for tpu_custom_call.1']
    #allocation5 [shape = 'u8[8192]{0}', space=vmem, size = 0x2000, scoped, tag = 'output window, operand 0, single buffered']
    %7 = vsyncpa [#allocation3], 0
    %8 = vsyncpa [#allocation4], 0
    // Predicated region
    $region2: #{tpu_custom_call.1} parent=1 // pred_check
      _
    $region3: #{tpu_custom_call.1} parent=1 // pred_check_branch
      %10 = sbr.rel (0) target = $region5
    $region4: #{tpu_custom_call.1} parent=1 // pred_region
      _
    $region5: #{tpu_custom_call.1} parent=1 // pred_fallthru
      _
    // Predicated region
    $region6: #{tpu_custom_call.1} parent=1 // pred_check
      _
    $region7: #{tpu_custom_call.1} parent=1 // pred_check_branch
      %12 = sbr.rel (0) target = $region9
    $region8: #{tpu_custom_call.1} parent=1 // pred_region
      %s14 = ssub.s32 1024, 1024
      %15 = vsyncadd [#allocation3], %s14
      %s16 = sshll.u32 [#allocation2], 4
      %s17 = int_to_ptr.vmem [resolvable:$true] %s16
      %22 = dma.hbm_to_vmem [thread:$0]  %s1, 1024, %s17, [#allocation3], 128, 128, 8
    $region9: #{tpu_custom_call.1} parent=1 // pred_fallthru
      _
    // Predicated region
    $region10: #{tpu_custom_call.1} parent=1 // pred_check
      _
    $region11: #{tpu_custom_call.1} parent=1 // pred_check_branch
      %24 = sbr.rel (0) target = $region13
    $region12: #{tpu_custom_call.1} parent=1 // pred_region
      %25 = dma.done [#allocation3], 1024
    $region13: #{tpu_custom_call.1} parent=1 // pred_fallthru
      _
    %p26 = scmp.eq.s32.totalorder 0, 0
    // Predicated region
    $region14: #{tpu_custom_call.1} parent=1 // pred_check
      %p27 = pneg %p26
    $region15: #{tpu_custom_call.1} parent=1 // pred_check_branch
      %29 = sbr.rel (%p27) target = $region17
    $region16: #{tpu_custom_call.1} parent=1 // pred_region
      %30 = vst [vmem:[#allocation5] sm:$0xff] 0.0
      %31 = vst [vmem:[#allocation5 + $0x8] sm:$0xff] 0.0
    $region17: #{tpu_custom_call.1} parent=1 // pred_fallthru
      _
    %v32 = vld [vmem:[%s0] sm:$0xff]
    %v33 = vld [vmem:[%s0 + $0x8] sm:$0xff]
    %s34 = smul.u32 0, 64
    %v35 = vstv %s34
    %v36 = vsub.s32 %v32, %v35
    %v37 = vsub.s32 %v33, %v35
    %v38 = vlaneseq
    %v39 = vand.u32 %v38, 127
    %40 = vset.pattern.permute.xlu0 0
    %41 = vperm.xlu0 %40, %v36
    %v42 = vpop.permute.xlu0 %41
    %43 = vset.pattern.permute.xlu0 0
    %44 = vperm.xlu0 %43, %v37
    %v45 = vpop.permute.xlu0 %44
    %vm46 = vcmp.eq.s32.totalorder %v39, %v42
    %vm47 = vcmp.eq.s32.totalorder %v39, %v45
    %v48 = vsel %vm46, 1, 0
    %v49 = vsel %vm47, 1, 0
    %v50 = vcvt.s32.f32 %v48
    %v51 = vcvt.s32.f32 %v49
    %v52 = vld [vmem:[#allocation5] sm:$0xff]
    %v53 = vld [vmem:[#allocation5 + $0x8] sm:$0xff]
    %v54 = vld [vmem:[#allocation2] sm:$0xff]
    %v55 = vld [vmem:[#allocation2 + $0x8] sm:$0xff]
    %v56 = vld [vmem:[#allocation2 + $0x10] sm:$0xff]
    %v57 = vld [vmem:[#allocation2 + $0x18] sm:$0xff]
    %v58 = vld [vmem:[#allocation2 + $0x20] sm:$0xff]
    %v59 = vld [vmem:[#allocation2 + $0x28] sm:$0xff]
    %v60 = vld [vmem:[#allocation2 + $0x30] sm:$0xff]
    %v61 = vld [vmem:[#allocation2 + $0x38] sm:$0xff]
    %vm62 = vcmask 523264
    %v64 = vsel %vm62, %v50, 0
    %v67 = vsel %vm62, %v51, 0
    %69 = vmatprep.subr.mxu0 0.0
    %v70 = vand.u32 %v54, 4294901760
    %71 = vmatpush1.msra.mxu0 %v70
    %72 = vmatprep.subr.mxu0 0.0
    %v73 = vand.u32 %v55, 4294901760
    %74 = vmatpush1.msra.mxu0 %v73
    %75 = vmatprep.subr.mxu0 0.0
    %v76 = vand.u32 %v56, 4294901760
    %77 = vmatpush1.msra.mxu0 %v76
    %78 = vmatprep.subr.mxu0 0.0
    %v79 = vand.u32 %v57, 4294901760
    %80 = vmatpush1.msra.mxu0 %v79
    %81 = vmatprep.subr.mxu0 0.0
    %v82 = vand.u32 %v58, 4294901760
    %83 = vmatpush1.msra.mxu0 %v82
    %84 = vmatprep.subr.mxu0 0.0
    %v85 = vand.u32 %v59, 4294901760
    %86 = vmatpush1.msra.mxu0 %v85
    %87 = vmatprep.subr.mxu0 0.0
    %v88 = vand.u32 %v60, 4294901760
    %89 = vmatpush1.msra.mxu0 %v88
    %90 = vmatprep.subr.mxu0 0.0
    %v91 = vand.u32 %v61, 4294901760
    %92 = vmatpush1.msra.mxu0 %v91
    %93 = vmatprep.subr.mxu0 0.0
    %94 = vmatpush1.msra.mxu0 0.0
    %95 = vmatprep.subr.mxu0 0.0
    %96 = vmatpush1.msra.mxu0 0.0
    %97 = vmatprep.subr.mxu0 0.0
    %98 = vmatpush1.msra.mxu0 0.0
    %99 = vmatprep.subr.mxu0 0.0
    %100 = vmatpush1.msra.mxu0 0.0
    %101 = vmatprep.subr.mxu0 0.0
    %102 = vmatpush1.msra.mxu0 0.0
    %103 = vmatprep.subr.mxu0 0.0
    %104 = vmatpush1.msra.mxu0 0.0
    %105 = vmatprep.subr.mxu0 0.0
    %106 = vmatpush1.msra.mxu0 0.0
    %107 = vmatprep.subr.mxu0 0.0
    %108 = vmatpush1.msra.mxu0 0.0
    %109 = vmatprep.subr.mxu0 0.0
    %110 = vmatpush1.msra.mxu0 0.0
    %111 = vmatprep.subr.mxu0 0.0
    %112 = vmatpush1.msra.mxu0 0.0
    %113 = vmatprep.subr.mxu0 0.0
    %114 = vmatpush1.msra.mxu0 0.0
    %115 = vmatprep.subr.mxu0 0.0
    %116 = vmatpush1.msra.mxu0 0.0
    %117 = vmatprep.subr.mxu0 0.0
    %118 = vmatpush1.msra.mxu0 0.0
    %119 = vmatprep.subr.mxu0 0.0
    %120 = vmatpush1.msra.mxu0 0.0
    %121 = vmatprep.subr.mxu0 0.0
    %122 = vmatpush1.msra.mxu0 0.0
    %123 = vmatprep.subr.mxu0 0.0
    %124 = vmatpush1.msra.mxu0 0.0
    %125 = vmatprep.subr.mxu0 0.0
    %126 = vmatpush1.msra.mxu0 0.0
    %127 = vmatprep.subr.mxu0 0.0
    %128 = vmatpush1.msra.mxu0 0.0
    %129 = vmatprep.subr.mxu0 0.0
    %130 = vmatpush1.msra.mxu0 0.0
    %131 = vmatprep.subr.mxu0 0.0
    %132 = vmatpush1.msra.mxu0 0.0
    %133 = vmatprep.subr.mxu0 0.0
    %134 = vmatpush1.msra.mxu0 0.0
    %135 = vmatprep.subr.mxu0 0.0
    %136 = vmatpush1.msra.mxu0 0.0
    %137 = vmatprep.subr.mxu0 0.0
    %138 = vmatpush1.msra.mxu0 0.0
    %139 = vmatprep.subr.mxu0 0.0
    %140 = vmatpush1.msra.mxu0 0.0
    %141 = vmatprep.mubr.f32.mxu0 0.0
    %v142 = vand.u32 %v64, 4294901760
    %v143 = vsub.f32 %v64, %v142
    %v144 = vand.u32 %v143, 4294901760
    %v145 = vsub.f32 %v143, %v144
    %v146 = vand.u32 %v145, 4294901760
    %147 = vmatmul.mubr.f32.gmra.mrb[0].mxu0 %v146
    %v148 = vpop.f32.mrb[0].mxu0
    %v149 = vadd.f32 0.0, %v148
    %v150 = vpop.f32.mrb[0].mxu0
    %151 = vmatprep.mubr.f32.mxu0 0.0
    %v152 = vand.u32 %v67, 4294901760
    %v153 = vsub.f32 %v67, %v152
    %v154 = vand.u32 %v153, 4294901760
    %v155 = vsub.f32 %v153, %v154
    %v156 = vand.u32 %v155, 4294901760
    %157 = vmatmul.mubr.f32.gmra.mrb[0].mxu0 %v156
    %v158 = vpop.f32.mrb[0].mxu0
    %v159 = vadd.f32 0.0, %v158
    %v160 = vpop.f32.mrb[0].mxu0
    %161 = vdwg.mxu0
    %162 = vmatprep.subr.mxu0 0.0
    %v163 = vand.u32 %v54, 4294901760
    %v164 = vsub.f32 %v54, %v163
    %v165 = vand.u32 %v164, 4294901760
    %v166 = vsub.f32 %v164, %v165
    %v167 = vand.u32 %v166, 4294901760
    %168 = vmatpush1.msra.mxu0 %v167
    %169 = vmatprep.subr.mxu0 0.0
    %v170 = vand.u32 %v55, 4294901760
    %v171 = vsub.f32 %v55, %v170
    %v172 = vand.u32 %v171, 4294901760
    %v173 = vsub.f32 %v171, %v172
    %v174 = vand.u32 %v173, 4294901760
    %175 = vmatpush1.msra.mxu0 %v174
    %176 = vmatprep.subr.mxu0 0.0
    %v177 = vand.u32 %v56, 4294901760
    %v178 = vsub.f32 %v56, %v177
    %v179 = vand.u32 %v178, 4294901760
    %v180 = vsub.f32 %v178, %v179
    %v181 = vand.u32 %v180, 4294901760
    %182 = vmatpush1.msra.mxu0 %v181
    %183 = vmatprep.subr.mxu0 0.0
    %v184 = vand.u32 %v57, 4294901760
    %v185 = vsub.f32 %v57, %v184
    %v186 = vand.u32 %v185, 4294901760
    %v187 = vsub.f32 %v185, %v186
    %v188 = vand.u32 %v187, 4294901760
    %189 = vmatpush1.msra.mxu0 %v188
    %190 = vmatprep.subr.mxu0 0.0
    %v191 = vand.u32 %v58, 4294901760
    %v192 = vsub.f32 %v58, %v191
    %v193 = vand.u32 %v192, 4294901760
    %v194 = vsub.f32 %v192, %v193
    %v195 = vand.u32 %v194, 4294901760
    %196 = vmatpush1.msra.mxu0 %v195
    %197 = vmatprep.subr.mxu0 0.0
    %v198 = vand.u32 %v59, 4294901760
    %v199 = vsub.f32 %v59, %v198
    %v200 = vand.u32 %v199, 4294901760
    %v201 = vsub.f32 %v199, %v200
    %v202 = vand.u32 %v201, 4294901760
    %203 = vmatpush1.msra.mxu0 %v202
    %204 = vmatprep.subr.mxu0 0.0
    %v205 = vand.u32 %v60, 4294901760
    %v206 = vsub.f32 %v60, %v205
    %v207 = vand.u32 %v206, 4294901760
    %v208 = vsub.f32 %v206, %v207
    %v209 = vand.u32 %v208, 4294901760
    %210 = vmatpush1.msra.mxu0 %v209
    %211 = vmatprep.subr.mxu0 0.0
    %v212 = vand.u32 %v61, 4294901760
    %v213 = vsub.f32 %v61, %v212
    %v214 = vand.u32 %v213, 4294901760
    %v215 = vsub.f32 %v213, %v214
    %v216 = vand.u32 %v215, 4294901760
    %217 = vmatpush1.msra.mxu0 %v216
    %218 = vmatprep.subr.mxu0 0.0
    %219 = vmatpush1.msra.mxu0 0.0
    %220 = vmatprep.subr.mxu0 0.0
    %221 = vmatpush1.msra.mxu0 0.0
    %222 = vmatprep.subr.mxu0 0.0
    %223 = vmatpush1.msra.mxu0 0.0
    %224 = vmatprep.subr.mxu0 0.0
    %225 = vmatpush1.msra.mxu0 0.0
    %226 = vmatprep.subr.mxu0 0.0
    %227 = vmatpush1.msra.mxu0 0.0
    %228 = vmatprep.subr.mxu0 0.0
    %229 = vmatpush1.msra.mxu0 0.0
    %230 = vmatprep.subr.mxu0 0.0
    %231 = vmatpush1.msra.mxu0 0.0
    %232 = vmatprep.subr.mxu0 0.0
    %233 = vmatpush1.msra.mxu0 0.0
    %234 = vmatprep.subr.mxu0 0.0
    %235 = vmatpush1.msra.mxu0 0.0
    %236 = vmatprep.subr.mxu0 0.0
    %237 = vmatpush1.msra.mxu0 0.0
    %238 = vmatprep.subr.mxu0 0.0
    %239 = vmatpush1.msra.mxu0 0.0
    %240 = vmatprep.subr.mxu0 0.0
    %241 = vmatpush1.msra.mxu0 0.0
    %242 = vmatprep.subr.mxu0 0.0
    %243 = vmatpush1.msra.mxu0 0.0
    %244 = vmatprep.subr.mxu0 0.0
    %245 = vmatpush1.msra.mxu0 0.0
    %246 = vmatprep.subr.mxu0 0.0
    %247 = vmatpush1.msra.mxu0 0.0
    %248 = vmatprep.subr.mxu0 0.0
    %249 = vmatpush1.msra.mxu0 0.0
    %250 = vmatprep.subr.mxu0 0.0
    %251 = vmatpush1.msra.mxu0 0.0
    %252 = vmatprep.subr.mxu0 0.0
    %253 = vmatpush1.msra.mxu0 0.0
    %254 = vmatprep.subr.mxu0 0.0
    %255 = vmatpush1.msra.mxu0 0.0
    %256 = vmatprep.subr.mxu0 0.0
    %257 = vmatpush1.msra.mxu0 0.0
    %258 = vmatprep.subr.mxu0 0.0
    %259 = vmatpush1.msra.mxu0 0.0
    %260 = vmatprep.subr.mxu0 0.0
    %261 = vmatpush1.msra.mxu0 0.0
    %262 = vmatprep.subr.mxu0 0.0
    %263 = vmatpush1.msra.mxu0 0.0
    %264 = vmatprep.subr.mxu0 0.0
    %265 = vmatpush1.msra.mxu0 0.0
    %266 = vmatprep.mubr.f32.mxu0 0.0
    %v267 = vand.u32 %v64, 4294901760
    %268 = vmatmul.mubr.f32.gmra.mrb[0].mxu0 %v267
    %v269 = vpop.f32.mrb[0].mxu0
    %v270 = vadd.f32 %v149, %v269
    %v271 = vpop.f32.mrb[0].mxu0
    %272 = vmatprep.mubr.f32.mxu0 0.0
    %v273 = vand.u32 %v67, 4294901760
    %274 = vmatmul.mubr.f32.gmra.mrb[0].mxu0 %v273
    %v275 = vpop.f32.mrb[0].mxu0
    %v276 = vadd.f32 %v159, %v275
    %v277 = vpop.f32.mrb[0].mxu0
    %278 = vdwg.mxu0
    %279 = vmatprep.subr.mxu0 0.0
    %v280 = vand.u32 %v54, 4294901760
    %v281 = vsub.f32 %v54, %v280
    %282 = vmatpush1.msra.mxu0 %v281
    %283 = vmatprep.subr.mxu0 0.0
    %v284 = vand.u32 %v55, 4294901760
    %v285 = vsub.f32 %v55, %v284
    %286 = vmatpush1.msra.mxu0 %v285
    %287 = vmatprep.subr.mxu0 0.0
    %v288 = vand.u32 %v56, 4294901760
    %v289 = vsub.f32 %v56, %v288
    %290 = vmatpush1.msra.mxu0 %v289
    %291 = vmatprep.subr.mxu0 0.0
    %v292 = vand.u32 %v57, 4294901760
    %v293 = vsub.f32 %v57, %v292
    %294 = vmatpush1.msra.mxu0 %v293
    %295 = vmatprep.subr.mxu0 0.0
    %v296 = vand.u32 %v58, 4294901760
    %v297 = vsub.f32 %v58, %v296
    %298 = vmatpush1.msra.mxu0 %v297
    %299 = vmatprep.subr.mxu0 0.0
    %v300 = vand.u32 %v59, 4294901760
    %v301 = vsub.f32 %v59, %v300
    %302 = vmatpush1.msra.mxu0 %v301
    %303 = vmatprep.subr.mxu0 0.0
    %v304 = vand.u32 %v60, 4294901760
    %v305 = vsub.f32 %v60, %v304
    %306 = vmatpush1.msra.mxu0 %v305
    %307 = vmatprep.subr.mxu0 0.0
    %v308 = vand.u32 %v61, 4294901760
    %v309 = vsub.f32 %v61, %v308
    %310 = vmatpush1.msra.mxu0 %v309
    %311 = vmatprep.subr.mxu0 0.0
    %312 = vmatpush1.msra.mxu0 0.0
    %313 = vmatprep.subr.mxu0 0.0
    %314 = vmatpush1.msra.mxu0 0.0
    %315 = vmatprep.subr.mxu0 0.0
    %316 = vmatpush1.msra.mxu0 0.0
    %317 = vmatprep.subr.mxu0 0.0
    %318 = vmatpush1.msra.mxu0 0.0
    %319 = vmatprep.subr.mxu0 0.0
    %320 = vmatpush1.msra.mxu0 0.0
    %321 = vmatprep.subr.mxu0 0.0
    %322 = vmatpush1.msra.mxu0 0.0
    %323 = vmatprep.subr.mxu0 0.0
    %324 = vmatpush1.msra.mxu0 0.0
    %325 = vmatprep.subr.mxu0 0.0
    %326 = vmatpush1.msra.mxu0 0.0
    %327 = vmatprep.subr.mxu0 0.0
    %328 = vmatpush1.msra.mxu0 0.0
    %329 = vmatprep.subr.mxu0 0.0
    %330 = vmatpush1.msra.mxu0 0.0
    %331 = vmatprep.subr.mxu0 0.0
    %332 = vmatpush1.msra.mxu0 0.0
    %333 = vmatprep.subr.mxu0 0.0
    %334 = vmatpush1.msra.mxu0 0.0
    %335 = vmatprep.subr.mxu0 0.0
    %336 = vmatpush1.msra.mxu0 0.0
    %337 = vmatprep.subr.mxu0 0.0
    %338 = vmatpush1.msra.mxu0 0.0
    %339 = vmatprep.subr.mxu0 0.0
    %340 = vmatpush1.msra.mxu0 0.0
    %341 = vmatprep.subr.mxu0 0.0
    %342 = vmatpush1.msra.mxu0 0.0
    %343 = vmatprep.subr.mxu0 0.0
    %344 = vmatpush1.msra.mxu0 0.0
    %345 = vmatprep.subr.mxu0 0.0
    %346 = vmatpush1.msra.mxu0 0.0
    %347 = vmatprep.subr.mxu0 0.0
    %348 = vmatpush1.msra.mxu0 0.0
    %349 = vmatprep.subr.mxu0 0.0
    %350 = vmatpush1.msra.mxu0 0.0
    %351 = vmatprep.subr.mxu0 0.0
    %352 = vmatpush1.msra.mxu0 0.0
    %353 = vmatprep.subr.mxu0 0.0
    %354 = vmatpush1.msra.mxu0 0.0
    %355 = vmatprep.subr.mxu0 0.0
    %356 = vmatpush1.msra.mxu0 0.0
    %357 = vmatprep.subr.mxu0 0.0
    %358 = vmatpush1.msra.mxu0 0.0
    %359 = vmatprep.mubr.f32.mxu0 0.0
    %v360 = vand.u32 %v64, 4294901760
    %v361 = vsub.f32 %v64, %v360
    %362 = vmatmul.mubr.f32.gmra.mrb[0].mxu0 %v361
    %v363 = vpop.f32.mrb[0].mxu0
    %v364 = vadd.f32 %v270, %v363
    %v365 = vpop.f32.mrb[0].mxu0
    %366 = vmatprep.mubr.f32.mxu0 0.0
    %v367 = vand.u32 %v67, 4294901760
    %v368 = vsub.f32 %v67, %v367
    %369 = vmatmul.mubr.f32.gmra.mrb[0].mxu0 %v368
    %v370 = vpop.f32.mrb[0].mxu0
    %v371 = vadd.f32 %v276, %v370
    %v372 = vpop.f32.mrb[0].mxu0
    %373 = vdwg.mxu0
    %374 = vmatprep.subr.mxu0 0.0
    %v375 = vand.u32 %v54, 4294901760
    %376 = vmatpush1.msra.mxu0 %v375
    %377 = vmatprep.subr.mxu0 0.0
    %v378 = vand.u32 %v55, 4294901760
    %379 = vmatpush1.msra.mxu0 %v378
    %380 = vmatprep.subr.mxu0 0.0
    %v381 = vand.u32 %v56, 4294901760
    %382 = vmatpush1.msra.mxu0 %v381
    %383 = vmatprep.subr.mxu0 0.0
    %v384 = vand.u32 %v57, 4294901760
    %385 = vmatpush1.msra.mxu0 %v384
    %386 = vmatprep.subr.mxu0 0.0
    %v387 = vand.u32 %v58, 4294901760
    %388 = vmatpush1.msra.mxu0 %v387
    %389 = vmatprep.subr.mxu0 0.0
    %v390 = vand.u32 %v59, 4294901760
    %391 = vmatpush1.msra.mxu0 %v390
    %392 = vmatprep.subr.mxu0 0.0
    %v393 = vand.u32 %v60, 4294901760
    %394 = vmatpush1.msra.mxu0 %v393
    %395 = vmatprep.subr.mxu0 0.0
    %v396 = vand.u32 %v61, 4294901760
    %397 = vmatpush1.msra.mxu0 %v396
    %398 = vmatprep.subr.mxu0 0.0
    %399 = vmatpush1.msra.mxu0 0.0
    %400 = vmatprep.subr.mxu0 0.0
    %401 = vmatpush1.msra.mxu0 0.0
    %402 = vmatprep.subr.mxu0 0.0
    %403 = vmatpush1.msra.mxu0 0.0
    %404 = vmatprep.subr.mxu0 0.0
    %405 = vmatpush1.msra.mxu0 0.0
    %406 = vmatprep.subr.mxu0 0.0
    %407 = vmatpush1.msra.mxu0 0.0
    %408 = vmatprep.subr.mxu0 0.0
    %409 = vmatpush1.msra.mxu0 0.0
    %410 = vmatprep.subr.mxu0 0.0
    %411 = vmatpush1.msra.mxu0 0.0
    %412 = vmatprep.subr.mxu0 0.0
    %413 = vmatpush1.msra.mxu0 0.0
    %414 = vmatprep.subr.mxu0 0.0
    %415 = vmatpush1.msra.mxu0 0.0
    %416 = vmatprep.subr.mxu0 0.0
    %417 = vmatpush1.msra.mxu0 0.0
    %418 = vmatprep.subr.mxu0 0.0
    %419 = vmatpush1.msra.mxu0 0.0
    %420 = vmatprep.subr.mxu0 0.0
    %421 = vmatpush1.msra.mxu0 0.0
    %422 = vmatprep.subr.mxu0 0.0
    %423 = vmatpush1.msra.mxu0 0.0
    %424 = vmatprep.subr.mxu0 0.0
    %425 = vmatpush1.msra.mxu0 0.0
    %426 = vmatprep.subr.mxu0 0.0
    %427 = vmatpush1.msra.mxu0 0.0
    %428 = vmatprep.subr.mxu0 0.0
    %429 = vmatpush1.msra.mxu0 0.0
    %430 = vmatprep.subr.mxu0 0.0
    %431 = vmatpush1.msra.mxu0 0.0
    %432 = vmatprep.subr.mxu0 0.0
    %433 = vmatpush1.msra.mxu0 0.0
    %434 = vmatprep.subr.mxu0 0.0
    %435 = vmatpush1.msra.mxu0 0.0
    %436 = vmatprep.subr.mxu0 0.0
    %437 = vmatpush1.msra.mxu0 0.0
    %438 = vmatprep.subr.mxu0 0.0
    %439 = vmatpush1.msra.mxu0 0.0
    %440 = vmatprep.subr.mxu0 0.0
    %441 = vmatpush1.msra.mxu0 0.0
    %442 = vmatprep.subr.mxu0 0.0
    %443 = vmatpush1.msra.mxu0 0.0
    %444 = vmatprep.subr.mxu0 0.0
    %445 = vmatpush1.msra.mxu0 0.0
    %446 = vmatprep.mubr.f32.mxu0 0.0
    %v447 = vand.u32 %v64, 4294901760
    %v448 = vsub.f32 %v64, %v447
    %v449 = vand.u32 %v448, 4294901760
    %450 = vmatmul.mubr.f32.gmra.mrb[0].mxu0 %v449
    %v451 = vpop.f32.mrb[0].mxu0
    %v452 = vadd.f32 %v364, %v451
    %v453 = vpop.f32.mrb[0].mxu0
    %454 = vmatprep.mubr.f32.mxu0 0.0
    %v455 = vand.u32 %v67, 4294901760
    %v456 = vsub.f32 %v67, %v455
    %v457 = vand.u32 %v456, 4294901760
    %458 = vmatmul.mubr.f32.gmra.mrb[0].mxu0 %v457
    %v459 = vpop.f32.mrb[0].mxu0
    %v460 = vadd.f32 %v371, %v459
    %v461 = vpop.f32.mrb[0].mxu0
    %462 = vdwg.mxu0
    %463 = vmatprep.subr.mxu0 0.0
    %v464 = vand.u32 %v54, 4294901760
    %v465 = vsub.f32 %v54, %v464
    %v466 = vand.u32 %v465, 4294901760
    %467 = vmatpush1.msra.mxu0 %v466
    %468 = vmatprep.subr.mxu0 0.0
    %v469 = vand.u32 %v55, 4294901760
    %v470 = vsub.f32 %v55, %v469
    %v471 = vand.u32 %v470, 4294901760
    %472 = vmatpush1.msra.mxu0 %v471
    %473 = vmatprep.subr.mxu0 0.0
    %v474 = vand.u32 %v56, 4294901760
    %v475 = vsub.f32 %v56, %v474
    %v476 = vand.u32 %v475, 4294901760
    %477 = vmatpush1.msra.mxu0 %v476
    %478 = vmatprep.subr.mxu0 0.0
    %v479 = vand.u32 %v57, 4294901760
    %v480 = vsub.f32 %v57, %v479
    %v481 = vand.u32 %v480, 4294901760
    %482 = vmatpush1.msra.mxu0 %v481
    %483 = vmatprep.subr.mxu0 0.0
    %v484 = vand.u32 %v58, 4294901760
    %v485 = vsub.f32 %v58, %v484
    %v486 = vand.u32 %v485, 4294901760
    %487 = vmatpush1.msra.mxu0 %v486
    %488 = vmatprep.subr.mxu0 0.0
    %v489 = vand.u32 %v59, 4294901760
    %v490 = vsub.f32 %v59, %v489
    %v491 = vand.u32 %v490, 4294901760
    %492 = vmatpush1.msra.mxu0 %v491
    %493 = vmatprep.subr.mxu0 0.0
    %v494 = vand.u32 %v60, 4294901760
    %v495 = vsub.f32 %v60, %v494
    %v496 = vand.u32 %v495, 4294901760
    %497 = vmatpush1.msra.mxu0 %v496
    %498 = vmatprep.subr.mxu0 0.0
    %v499 = vand.u32 %v61, 4294901760
    %v500 = vsub.f32 %v61, %v499
    %v501 = vand.u32 %v500, 4294901760
    %502 = vmatpush1.msra.mxu0 %v501
    %503 = vmatprep.subr.mxu0 0.0
    %504 = vmatpush1.msra.mxu0 0.0
    %505 = vmatprep.subr.mxu0 0.0
    %506 = vmatpush1.msra.mxu0 0.0
    %507 = vmatprep.subr.mxu0 0.0
    %508 = vmatpush1.msra.mxu0 0.0
    %509 = vmatprep.subr.mxu0 0.0
    %510 = vmatpush1.msra.mxu0 0.0
    %511 = vmatprep.subr.mxu0 0.0
    %512 = vmatpush1.msra.mxu0 0.0
    %513 = vmatprep.subr.mxu0 0.0
    %514 = vmatpush1.msra.mxu0 0.0
    %515 = vmatprep.subr.mxu0 0.0
    %516 = vmatpush1.msra.mxu0 0.0
    %517 = vmatprep.subr.mxu0 0.0
    %518 = vmatpush1.msra.mxu0 0.0
    %519 = vmatprep.subr.mxu0 0.0
    %520 = vmatpush1.msra.mxu0 0.0
    %521 = vmatprep.subr.mxu0 0.0
    %522 = vmatpush1.msra.mxu0 0.0
    %523 = vmatprep.subr.mxu0 0.0
    %524 = vmatpush1.msra.mxu0 0.0
    %525 = vmatprep.subr.mxu0 0.0
    %526 = vmatpush1.msra.mxu0 0.0
    %527 = vmatprep.subr.mxu0 0.0
    %528 = vmatpush1.msra.mxu0 0.0
    %529 = vmatprep.subr.mxu0 0.0
    %530 = vmatpush1.msra.mxu0 0.0
    %531 = vmatprep.subr.mxu0 0.0
    %532 = vmatpush1.msra.mxu0 0.0
    %533 = vmatprep.subr.mxu0 0.0
    %534 = vmatpush1.msra.mxu0 0.0
    %535 = vmatprep.subr.mxu0 0.0
    %536 = vmatpush1.msra.mxu0 0.0
    %537 = vmatprep.subr.mxu0 0.0
    %538 = vmatpush1.msra.mxu0 0.0
    %539 = vmatprep.subr.mxu0 0.0
    %540 = vmatpush1.msra.mxu0 0.0
    %541 = vmatprep.subr.mxu0 0.0
    %542 = vmatpush1.msra.mxu0 0.0
    %543 = vmatprep.subr.mxu0 0.0
    %544 = vmatpush1.msra.mxu0 0.0
    %545 = vmatprep.subr.mxu0 0.0
    %546 = vmatpush1.msra.mxu0 0.0
    %547 = vmatprep.subr.mxu0 0.0
    %548 = vmatpush1.msra.mxu0 0.0
    %549 = vmatprep.subr.mxu0 0.0
    %550 = vmatpush1.msra.mxu0 0.0
    %551 = vmatprep.mubr.f32.mxu0 0.0
    %v552 = vand.u32 %v64, 4294901760
    %553 = vmatmul.mubr.f32.gmra.mrb[0].mxu0 %v552
    %v554 = vpop.f32.mrb[0].mxu0
    %v555 = vadd.f32 %v452, %v554
    %v556 = vpop.f32.mrb[0].mxu0
    %557 = vmatprep.mubr.f32.mxu0 0.0
    %v558 = vand.u32 %v67, 4294901760
    %559 = vmatmul.mubr.f32.gmra.mrb[0].mxu0 %v558
    %v560 = vpop.f32.mrb[0].mxu0
    %v561 = vadd.f32 %v460, %v560
    %v562 = vpop.f32.mrb[0].mxu0
    %563 = vdwg.mxu0
    %564 = vmatprep.subr.mxu0 0.0
    %v565 = vand.u32 %v54, 4294901760
    %566 = vmatpush1.msra.mxu0 %v565
    %567 = vmatprep.subr.mxu0 0.0
    %v568 = vand.u32 %v55, 4294901760
    %569 = vmatpush1.msra.mxu0 %v568
    %570 = vmatprep.subr.mxu0 0.0
    %v571 = vand.u32 %v56, 4294901760
    %572 = vmatpush1.msra.mxu0 %v571
    %573 = vmatprep.subr.mxu0 0.0
    %v574 = vand.u32 %v57, 4294901760
    %575 = vmatpush1.msra.mxu0 %v574
    %576 = vmatprep.subr.mxu0 0.0
    %v577 = vand.u32 %v58, 4294901760
    %578 = vmatpush1.msra.mxu0 %v577
    %579 = vmatprep.subr.mxu0 0.0
    %v580 = vand.u32 %v59, 4294901760
    %581 = vmatpush1.msra.mxu0 %v580
    %582 = vmatprep.subr.mxu0 0.0
    %v583 = vand.u32 %v60, 4294901760
    %584 = vmatpush1.msra.mxu0 %v583
    %585 = vmatprep.subr.mxu0 0.0
    %v586 = vand.u32 %v61, 4294901760
    %587 = vmatpush1.msra.mxu0 %v586
    %588 = vmatprep.subr.mxu0 0.0
    %589 = vmatpush1.msra.mxu0 0.0
    %590 = vmatprep.subr.mxu0 0.0
    %591 = vmatpush1.msra.mxu0 0.0
    %592 = vmatprep.subr.mxu0 0.0
    %593 = vmatpush1.msra.mxu0 0.0
    %594 = vmatprep.subr.mxu0 0.0
    %595 = vmatpush1.msra.mxu0 0.0
    %596 = vmatprep.subr.mxu0 0.0
    %597 = vmatpush1.msra.mxu0 0.0
    %598 = vmatprep.subr.mxu0 0.0
    %599 = vmatpush1.msra.mxu0 0.0
    %600 = vmatprep.subr.mxu0 0.0
    %601 = vmatpush1.msra.mxu0 0.0
    %602 = vmatprep.subr.mxu0 0.0
    %603 = vmatpush1.msra.mxu0 0.0
    %604 = vmatprep.subr.mxu0 0.0
    %605 = vmatpush1.msra.mxu0 0.0
    %606 = vmatprep.subr.mxu0 0.0
    %607 = vmatpush1.msra.mxu0 0.0
    %608 = vmatprep.subr.mxu0 0.0
    %609 = vmatpush1.msra.mxu0 0.0
    %610 = vmatprep.subr.mxu0 0.0
    %611 = vmatpush1.msra.mxu0 0.0
    %612 = vmatprep.subr.mxu0 0.0
    %613 = vmatpush1.msra.mxu0 0.0
    %614 = vmatprep.subr.mxu0 0.0
    %615 = vmatpush1.msra.mxu0 0.0
    %616 = vmatprep.subr.mxu0 0.0
    %617 = vmatpush1.msra.mxu0 0.0
    %618 = vmatprep.subr.mxu0 0.0
    %619 = vmatpush1.msra.mxu0 0.0
    %620 = vmatprep.subr.mxu0 0.0
    %621 = vmatpush1.msra.mxu0 0.0
    %622 = vmatprep.subr.mxu0 0.0
    %623 = vmatpush1.msra.mxu0 0.0
    %624 = vmatprep.subr.mxu0 0.0
    %625 = vmatpush1.msra.mxu0 0.0
    %626 = vmatprep.subr.mxu0 0.0
    %627 = vmatpush1.msra.mxu0 0.0
    %628 = vmatprep.subr.mxu0 0.0
    %629 = vmatpush1.msra.mxu0 0.0
    %630 = vmatprep.subr.mxu0 0.0
    %631 = vmatpush1.msra.mxu0 0.0
    %632 = vmatprep.subr.mxu0 0.0
    %633 = vmatpush1.msra.mxu0 0.0
    %634 = vmatprep.subr.mxu0 0.0
    %635 = vmatpush1.msra.mxu0 0.0
    %636 = vmatprep.mubr.f32.mxu0 0.0
    %v637 = vand.u32 %v64, 4294901760
    %638 = vmatmul.mubr.f32.gmra.mrb[0].mxu0 %v637
    %v639 = vpop.f32.mrb[0].mxu0
    %v640 = vadd.f32 %v555, %v639
    %v641 = vpop.f32.mrb[0].mxu0
    %642 = vmatprep.mubr.f32.mxu0 0.0
    %v643 = vand.u32 %v67, 4294901760
    %644 = vmatmul.mubr.f32.gmra.mrb[0].mxu0 %v643
    %v645 = vpop.f32.mrb[0].mxu0
    %v646 = vadd.f32 %v561, %v645
    %v647 = vpop.f32.mrb[0].mxu0
    %648 = vdwg.mxu0
    %v649 = vadd.f32 %v52, %v640
    %v650 = vadd.f32 %v53, %v646
    %651 = vst [vmem:[#allocation5] sm:$0xff] %v649
    %652 = vst [vmem:[#allocation5 + $0x8] sm:$0xff] %v650
    // Predicated region
    $region18: #{tpu_custom_call.1} parent=1 // pred_check
      _
    $region19: #{tpu_custom_call.1} parent=1 // pred_check_branch
      %654 = sbr.rel (0) target = $region21
    $region20: #{tpu_custom_call.1} parent=1 // pred_region
      %s656 = ssub.s32 256, 256
      %657 = vsyncadd [#allocation4], %s656
      %s658 = sshll.u32 [#allocation5], 4
      %s659 = int_to_ptr.vmem [resolvable:$true] %s658
      %664 = dma.vmem_to_hbm [thread:$0]  %s659, 256, %s2, [#allocation4], 128, 128, 8
    $region21: #{tpu_custom_call.1} parent=1 // pred_fallthru
      _
    // Predicated region
    $region22: #{tpu_custom_call.1} parent=1 // pred_check
      _
    $region23: #{tpu_custom_call.1} parent=1 // pred_check_branch
      %666 = sbr.rel (0) target = $region25
    $region24: #{tpu_custom_call.1} parent=1 // pred_region
      %667 = dma.done [#allocation4], 256
    $region25: #{tpu_custom_call.1} parent=1 // pred_fallthru
      _
    %668 = vsyncpa [#allocation3], 1
    %669 = vsyncpa [#allocation4], 1

// kernel: tpu_custom_call.1
$region0: #{tpu_custom_call.1}
  #allocation0 [shape = 'u32[]', space=smem, size = 0x4, offset = 0x4, fixed_abs, tag = 'smem constant byte address 0x4 - core index']
  #allocation1 [shape = 'u32[144,128]{1,0:T(1,128)}', space=vmem, size = 0x12000, scoped, tag = 'internal scratch']
  %s0 = inlined_call_operand.vmem [shape: s32[16,1], index: 0, kind: input, shape index: {}]
  %s1 = inlined_call_operand.hbm [shape: f32[64,128], index: 1, kind: input, shape index: {}]
  %s2 = inlined_call_operand.hbm [shape: f32[16,128], index: 2, kind: output, shape index: {}]
  %s3 = sld [smem:[#allocation0]]
  $region26: #{tpu_custom_call.1} parent=0
    _
  %s5 = ssub.s32 1, %s3
  %s6 = scalar_select 0, %s5, %s3
  $region1: #{tpu_custom_call.1} parent=0
    #allocation2 [shape = 'u8[32768]{0}', space=vmem, size = 0x8000, scoped, tag = 'input window, operand 1, single buffered']
    #allocation3 [shape = 's32[1]{0}', space=sflag, size = 0x4, scoped, tag = 'scoped memory for tpu_custom_call.1']
    #allocation4 [shape = 's32[1]{0}', space=sflag, size = 0x4, scoped, tag = 'scoped memory for tpu_custom_call.1']
    #allocation5 [shape = 'u8[8192]{0}', space=vmem, size = 0x2000, scoped, tag = 'output window, operand 0, single buffered']
    %7 = vsyncpa [#allocation3], 0
    %8 = vsyncpa [#allocation4], 0
    // Predicated region
    $region2: #{tpu_custom_call.1} parent=1 // pred_check
      _
    $region3: #{tpu_custom_call.1} parent=1 // pred_check_branch
      %10 = sbr.rel (0) target = $region5
    $region4: #{tpu_custom_call.1} parent=1 // pred_region
      _
    $region5: #{tpu_custom_call.1} parent=1 // pred_fallthru
      _
    // Predicated region
    $region6: #{tpu_custom_call.1} parent=1 // pred_check
      _
    $region7: #{tpu_custom_call.1} parent=1 // pred_check_branch
      %12 = sbr.rel (0) target = $region9
    $region8: #{tpu_custom_call.1} parent=1 // pred_region
      %s14 = ssub.s32 1024, 1024
      %15 = vsyncadd [#allocation3], %s14
      %s16 = sshll.u32 [#allocation2], 4
      %s17 = int_to_ptr.vmem [resolvable:$true] %s16
      %22 = dma.hbm_to_vmem [thread:$0]  %s1, 1024, %s17, [#allocation3], 128, 128, 8
    $region9: #{tpu_custom_call.1} parent=1 // pred_fallthru
      _
    // Predicated region
    $region10: #{tpu_custom_call.1} parent=1 // pred_check
      _
    $region11: #{tpu_custom_call.1} parent=1 // pred_check_branch
      %24 = sbr.rel (0) target = $region13
    $region12: #{tpu_custom_call.1} parent=1 // pred_region
      %25 = dma.done [#allocation3], 1024
    $region13: #{tpu_custom_call.1} parent=1 // pred_fallthru
      _
    %p26 = scmp.eq.s32.totalorder 0, 0
    // Predicated region
    $region14: #{tpu_custom_call.1} parent=1 // pred_check
      %p27 = pneg %p26
    $region15: #{tpu_custom_call.1} parent=1 // pred_check_branch
      %29 = sbr.rel (%p27) target = $region17
    $region16: #{tpu_custom_call.1} parent=1 // pred_region
      %30 = vst [vmem:[#allocation5] sm:$0xff] 0.0
      %31 = vst [vmem:[#allocation5 + $0x8] sm:$0xff] 0.0
    $region17: #{tpu_custom_call.1} parent=1 // pred_fallthru
      _
    %v32 = vld [vmem:[%s0] sm:$0xff]
    %v33 = vld [vmem:[%s0 + $0x8] sm:$0xff]
    %s34 = smul.u32 0, 64
    %v35 = vstv %s34
    %v36 = vsub.s32 %v32, %v35
    %v37 = vsub.s32 %v33, %v35
    %v38 = vlaneseq
    %v39 = vand.u32 %v38, 127
    %40 = vset.pattern.permute.xlu0 0
    %41 = vperm.xlu0 %40, %v36
    %v42 = vpop.permute.xlu0 %41
    %43 = vset.pattern.permute.xlu0 0
    %44 = vperm.xlu0 %43, %v37
    %v45 = vpop.permute.xlu0 %44
    %vm46 = vcmp.eq.s32.totalorder %v39, %v42
    %vm47 = vcmp.eq.s32.totalorder %v39, %v45
    %v48 = vsel %vm46, 1, 0
    %v49 = vsel %vm47, 1, 0
    %v50 = vcvt.s32.f32 %v48
    %v51 = vcvt.s32.f32 %v49
    %v52 = vld [vmem:[#allocation5] sm:$0xff]
    %v53 = vld [vmem:[#allocation5 + $0x8] sm:$0xff]
    %v54 = vld [vmem:[#allocation2] sm:$0xff]
    %v55 = vld [vmem:[#allocation2 + $0x8] sm:$0xff]
    %v56 = vld [vmem:[#allocation2 + $0x10] sm:$0xff]
    %v57 = vld [vmem:[#allocation2 + $0x18] sm:$0xff]
    %v58 = vld [vmem:[#allocation2 + $0x20] sm:$0xff]
    %v59 = vld [vmem:[#allocation2 + $0x28] sm:$0xff]
    %v60 = vld [vmem:[#allocation2 + $0x30] sm:$0xff]
    %v61 = vld [vmem:[#allocation2 + $0x38] sm:$0xff]
    %vm62 = vcmask 523264
    %v64 = vsel %vm62, %v50, 0
    %v67 = vsel %vm62, %v51, 0
    %69 = vmatprep.subr.mxu0 0.0
    %v70 = vand.u32 %v54, 4294901760
    %71 = vmatpush1.msra.mxu0 %v70
    %72 = vmatprep.subr.mxu0 0.0
    %v73 = vand.u32 %v55, 4294901760
    %74 = vmatpush1.msra.mxu0 %v73
    %75 = vmatprep.subr.mxu0 0.0
    %v76 = vand.u32 %v56, 4294901760
    %77 = vmatpush1.msra.mxu0 %v76
    %78 = vmatprep.subr.mxu0 0.0
    %v79 = vand.u32 %v57, 4294901760
    %80 = vmatpush1.msra.mxu0 %v79
    %81 = vmatprep.subr.mxu0 0.0
    %v82 = vand.u32 %v58, 4294901760
    %83 = vmatpush1.msra.mxu0 %v82
    %84 = vmatprep.subr.mxu0 0.0
    %v85 = vand.u32 %v59, 4294901760
    %86 = vmatpush1.msra.mxu0 %v85
    %87 = vmatprep.subr.mxu0 0.0
    %v88 = vand.u32 %v60, 4294901760
    %89 = vmatpush1.msra.mxu0 %v88
    %90 = vmatprep.subr.mxu0 0.0
    %v91 = vand.u32 %v61, 4294901760
    %92 = vmatpush1.msra.mxu0 %v91
    %93 = vmatprep.subr.mxu0 0.0
    %94 = vmatpush1.msra.mxu0 0.0
    %95 = vmatprep.subr.mxu0 0.0
    %96 = vmatpush1.msra.mxu0 0.0
    %97 = vmatprep.subr.mxu0 0.0
    %98 = vmatpush1.msra.mxu0 0.0
    %99 = vmatprep.subr.mxu0 0.0
    %100 = vmatpush1.msra.mxu0 0.0
    %101 = vmatprep.subr.mxu0 0.0
    %102 = vmatpush1.msra.mxu0 0.0
    %103 = vmatprep.subr.mxu0 0.0
    %104 = vmatpush1.msra.mxu0 0.0
    %105 = vmatprep.subr.mxu0 0.0
    %106 = vmatpush1.msra.mxu0 0.0
    %107 = vmatprep.subr.mxu0 0.0
    %108 = vmatpush1.msra.mxu0 0.0
    %109 = vmatprep.subr.mxu0 0.0
    %110 = vmatpush1.msra.mxu0 0.0
    %111 = vmatprep.subr.mxu0 0.0
    %112 = vmatpush1.msra.mxu0 0.0
    %113 = vmatprep.subr.mxu0 0.0
    %114 = vmatpush1.msra.mxu0 0.0
    %115 = vmatprep.subr.mxu0 0.0
    %116 = vmatpush1.msra.mxu0 0.0
    %117 = vmatprep.subr.mxu0 0.0
    %118 = vmatpush1.msra.mxu0 0.0
    %119 = vmatprep.subr.mxu0 0.0
    %120 = vmatpush1.msra.mxu0 0.0
    %121 = vmatprep.subr.mxu0 0.0
    %122 = vmatpush1.msra.mxu0 0.0
    %123 = vmatprep.subr.mxu0 0.0
    %124 = vmatpush1.msra.mxu0 0.0
    %125 = vmatprep.subr.mxu0 0.0
    %126 = vmatpush1.msra.mxu0 0.0
    %127 = vmatprep.subr.mxu0 0.0
    %128 = vmatpush1.msra.mxu0 0.0
    %129 = vmatprep.subr.mxu0 0.0
    %130 = vmatpush1.msra.mxu0 0.0
    %131 = vmatprep.subr.mxu0 0.0
    %132 = vmatpush1.msra.mxu0 0.0
    %133 = vmatprep.subr.mxu0 0.0
    %134 = vmatpush1.msra.mxu0 0.0
    %135 = vmatprep.subr.mxu0 0.0
    %136 = vmatpush1.msra.mxu0 0.0
    %137 = vmatprep.subr.mxu0 0.0
    %138 = vmatpush1.msra.mxu0 0.0
    %139 = vmatprep.subr.mxu0 0.0
    %140 = vmatpush1.msra.mxu0 0.0
    %141 = vmatprep.mubr.f32.mxu0 0.0
    %v142 = vand.u32 %v64, 4294901760
    %v143 = vsub.f32 %v64, %v142
    %v144 = vand.u32 %v143, 4294901760
    %v145 = vsub.f32 %v143, %v144
    %v146 = vand.u32 %v145, 4294901760
    %147 = vmatmul.mubr.f32.gmra.mrb[0].mxu0 %v146
    %v148 = vpop.f32.mrb[0].mxu0
    %v149 = vadd.f32 0.0, %v148
    %v150 = vpop.f32.mrb[0].mxu0
    %151 = vmatprep.mubr.f32.mxu0 0.0
    %v152 = vand.u32 %v67, 4294901760
    %v153 = vsub.f32 %v67, %v152
    %v154 = vand.u32 %v153, 4294901760
    %v155 = vsub.f32 %v153, %v154
    %v156 = vand.u32 %v155, 4294901760
    %157 = vmatmul.mubr.f32.gmra.mrb[0].mxu0 %v156
    %v158 = vpop.f32.mrb[0].mxu0
    %v159 = vadd.f32 0.0, %v158
    %v160 = vpop.f32.mrb[0].mxu0
    %161 = vdwg.mxu0
    %162 = vmatprep.subr.mxu0 0.0
    %v163 = vand.u32 %v54, 4294901760
    %v164 = vsub.f32 %v54, %v163
    %v165 = vand.u32 %v164, 4294901760
    %v166 = vsub.f32 %v164, %v165
    %v167 = vand.u32 %v166, 4294901760
    %168 = vmatpush1.msra.mxu0 %v167
    %169 = vmatprep.subr.mxu0 0.0
    %v170 = vand.u32 %v55, 4294901760
    %v171 = vsub.f32 %v55, %v170
    %v172 = vand.u32 %v171, 4294901760
    %v173 = vsub.f32 %v171, %v172
    %v174 = vand.u32 %v173, 4294901760
    %175 = vmatpush1.msra.mxu0 %v174
    %176 = vmatprep.subr.mxu0 0.0
    %v177 = vand.u32 %v56, 4294901760
    %v178 = vsub.f32 %v56, %v177
    %v179 = vand.u32 %v178, 4294901760
    %v180 = vsub.f32 %v178, %v179
    %v181 = vand.u32 %v180, 4294901760
    %182 = vmatpush1.msra.mxu0 %v181
    %183 = vmatprep.subr.mxu0 0.0
    %v184 = vand.u32 %v57, 4294901760
    %v185 = vsub.f32 %v57, %v184
    %v186 = vand.u32 %v185, 4294901760
    %v187 = vsub.f32 %v185, %v186
    %v188 = vand.u32 %v187, 4294901760
    %189 = vmatpush1.msra.mxu0 %v188
    %190 = vmatprep.subr.mxu0 0.0
    %v191 = vand.u32 %v58, 4294901760
    %v192 = vsub.f32 %v58, %v191
    %v193 = vand.u32 %v192, 4294901760
    %v194 = vsub.f32 %v192, %v193
    %v195 = vand.u32 %v194, 4294901760
    %196 = vmatpush1.msra.mxu0 %v195
    %197 = vmatprep.subr.mxu0 0.0
    %v198 = vand.u32 %v59, 4294901760
    %v199 = vsub.f32 %v59, %v198
    %v200 = vand.u32 %v199, 4294901760
    %v201 = vsub.f32 %v199, %v200
    %v202 = vand.u32 %v201, 4294901760
    %203 = vmatpush1.msra.mxu0 %v202
    %204 = vmatprep.subr.mxu0 0.0
    %v205 = vand.u32 %v60, 4294901760
    %v206 = vsub.f32 %v60, %v205
    %v207 = vand.u32 %v206, 4294901760
    %v208 = vsub.f32 %v206, %v207
    %v209 = vand.u32 %v208, 4294901760
    %210 = vmatpush1.msra.mxu0 %v209
    %211 = vmatprep.subr.mxu0 0.0
    %v212 = vand.u32 %v61, 4294901760
    %v213 = vsub.f32 %v61, %v212
    %v214 = vand.u32 %v213, 4294901760
    %v215 = vsub.f32 %v213, %v214
    %v216 = vand.u32 %v215, 4294901760
    %217 = vmatpush1.msra.mxu0 %v216
    %218 = vmatprep.subr.mxu0 0.0
    %219 = vmatpush1.msra.mxu0 0.0
    %220 = vmatprep.subr.mxu0 0.0
    %221 = vmatpush1.msra.mxu0 0.0
    %222 = vmatprep.subr.mxu0 0.0
    %223 = vmatpush1.msra.mxu0 0.0
    %224 = vmatprep.subr.mxu0 0.0
    %225 = vmatpush1.msra.mxu0 0.0
    %226 = vmatprep.subr.mxu0 0.0
    %227 = vmatpush1.msra.mxu0 0.0
    %228 = vmatprep.subr.mxu0 0.0
    %229 = vmatpush1.msra.mxu0 0.0
    %230 = vmatprep.subr.mxu0 0.0
    %231 = vmatpush1.msra.mxu0 0.0
    %232 = vmatprep.subr.mxu0 0.0
    %233 = vmatpush1.msra.mxu0 0.0
    %234 = vmatprep.subr.mxu0 0.0
    %235 = vmatpush1.msra.mxu0 0.0
    %236 = vmatprep.subr.mxu0 0.0
    %237 = vmatpush1.msra.mxu0 0.0
    %238 = vmatprep.subr.mxu0 0.0
    %239 = vmatpush1.msra.mxu0 0.0
    %240 = vmatprep.subr.mxu0 0.0
    %241 = vmatpush1.msra.mxu0 0.0
    %242 = vmatprep.subr.mxu0 0.0
    %243 = vmatpush1.msra.mxu0 0.0
    %244 = vmatprep.subr.mxu0 0.0
    %245 = vmatpush1.msra.mxu0 0.0
    %246 = vmatprep.subr.mxu0 0.0
    %247 = vmatpush1.msra.mxu0 0.0
    %248 = vmatprep.subr.mxu0 0.0
    %249 = vmatpush1.msra.mxu0 0.0
    %250 = vmatprep.subr.mxu0 0.0
    %251 = vmatpush1.msra.mxu0 0.0
    %252 = vmatprep.subr.mxu0 0.0
    %253 = vmatpush1.msra.mxu0 0.0
    %254 = vmatprep.subr.mxu0 0.0
    %255 = vmatpush1.msra.mxu0 0.0
    %256 = vmatprep.subr.mxu0 0.0
    %257 = vmatpush1.msra.mxu0 0.0
    %258 = vmatprep.subr.mxu0 0.0
    %259 = vmatpush1.msra.mxu0 0.0
    %260 = vmatprep.subr.mxu0 0.0
    %261 = vmatpush1.msra.mxu0 0.0
    %262 = vmatprep.subr.mxu0 0.0
    %263 = vmatpush1.msra.mxu0 0.0
    %264 = vmatprep.subr.mxu0 0.0
    %265 = vmatpush1.msra.mxu0 0.0
    %266 = vmatprep.mubr.f32.mxu0 0.0
    %v267 = vand.u32 %v64, 4294901760
    %268 = vmatmul.mubr.f32.gmra.mrb[0].mxu0 %v267
    %v269 = vpop.f32.mrb[0].mxu0
    %v270 = vadd.f32 %v149, %v269
    %v271 = vpop.f32.mrb[0].mxu0
    %272 = vmatprep.mubr.f32.mxu0 0.0
    %v273 = vand.u32 %v67, 4294901760
    %274 = vmatmul.mubr.f32.gmra.mrb[0].mxu0 %v273
    %v275 = vpop.f32.mrb[0].mxu0
    %v276 = vadd.f32 %v159, %v275
    %v277 = vpop.f32.mrb[0].mxu0
    %278 = vdwg.mxu0
    %279 = vmatprep.subr.mxu0 0.0
    %v280 = vand.u32 %v54, 4294901760
    %v281 = vsub.f32 %v54, %v280
    %282 = vmatpush1.msra.mxu0 %v281
    %283 = vmatprep.subr.mxu0 0.0
    %v284 = vand.u32 %v55, 4294901760
    %v285 = vsub.f32 %v55, %v284
    %286 = vmatpush1.msra.mxu0 %v285
    %287 = vmatprep.subr.mxu0 0.0
    %v288 = vand.u32 %v56, 4294901760
    %v289 = vsub.f32 %v56, %v288
    %290 = vmatpush1.msra.mxu0 %v289
    %291 = vmatprep.subr.mxu0 0.0
    %v292 = vand.u32 %v57, 4294901760
    %v293 = vsub.f32 %v57, %v292
    %294 = vmatpush1.msra.mxu0 %v293
    %295 = vmatprep.subr.mxu0 0.0
    %v296 = vand.u32 %v58, 4294901760
    %v297 = vsub.f32 %v58, %v296
    %298 = vmatpush1.msra.mxu0 %v297
    %299 = vmatprep.subr.mxu0 0.0
    %v300 = vand.u32 %v59, 4294901760
    %v301 = vsub.f32 %v59, %v300
    %302 = vmatpush1.msra.mxu0 %v301
    %303 = vmatprep.subr.mxu0 0.0
    %v304 = vand.u32 %v60, 4294901760
    %v305 = vsub.f32 %v60, %v304
    %306 = vmatpush1.msra.mxu0 %v305
    %307 = vmatprep.subr.mxu0 0.0
    %v308 = vand.u32 %v61, 4294901760
    %v309 = vsub.f32 %v61, %v308
    %310 = vmatpush1.msra.mxu0 %v309
    %311 = vmatprep.subr.mxu0 0.0
    %312 = vmatpush1.msra.mxu0 0.0
    %313 = vmatprep.subr.mxu0 0.0
    %314 = vmatpush1.msra.mxu0 0.0
    %315 = vmatprep.subr.mxu0 0.0
    %316 = vmatpush1.msra.mxu0 0.0
    %317 = vmatprep.subr.mxu0 0.0
    %318 = vmatpush1.msra.mxu0 0.0
    %319 = vmatprep.subr.mxu0 0.0
    %320 = vmatpush1.msra.mxu0 0.0
    %321 = vmatprep.subr.mxu0 0.0
    %322 = vmatpush1.msra.mxu0 0.0
    %323 = vmatprep.subr.mxu0 0.0
    %324 = vmatpush1.msra.mxu0 0.0
    %325 = vmatprep.subr.mxu0 0.0
    %326 = vmatpush1.msra.mxu0 0.0
    %327 = vmatprep.subr.mxu0 0.0
    %328 = vmatpush1.msra.mxu0 0.0
    %329 = vmatprep.subr.mxu0 0.0
    %330 = vmatpush1.msra.mxu0 0.0
    %331 = vmatprep.subr.mxu0 0.0
    %332 = vmatpush1.msra.mxu0 0.0
    %333 = vmatprep.subr.mxu0 0.0
    %334 = vmatpush1.msra.mxu0 0.0
    %335 = vmatprep.subr.mxu0 0.0
    %336 = vmatpush1.msra.mxu0 0.0
    %337 = vmatprep.subr.mxu0 0.0
    %338 = vmatpush1.msra.mxu0 0.0
    %339 = vmatprep.subr.mxu0 0.0
    %340 = vmatpush1.msra.mxu0 0.0
    %341 = vmatprep.subr.mxu0 0.0
    %342 = vmatpush1.msra.mxu0 0.0
    %343 = vmatprep.subr.mxu0 0.0
    %344 = vmatpush1.msra.mxu0 0.0
    %345 = vmatprep.subr.mxu0 0.0
    %346 = vmatpush1.msra.mxu0 0.0
    %347 = vmatprep.subr.mxu0 0.0
    %348 = vmatpush1.msra.mxu0 0.0
    %349 = vmatprep.subr.mxu0 0.0
    %350 = vmatpush1.msra.mxu0 0.0
    %351 = vmatprep.subr.mxu0 0.0
    %352 = vmatpush1.msra.mxu0 0.0
    %353 = vmatprep.subr.mxu0 0.0
    %354 = vmatpush1.msra.mxu0 0.0
    %355 = vmatprep.subr.mxu0 0.0
    %356 = vmatpush1.msra.mxu0 0.0
    %357 = vmatprep.subr.mxu0 0.0
    %358 = vmatpush1.msra.mxu0 0.0
    %359 = vmatprep.mubr.f32.mxu0 0.0
    %v360 = vand.u32 %v64, 4294901760
    %v361 = vsub.f32 %v64, %v360
    %362 = vmatmul.mubr.f32.gmra.mrb[0].mxu0 %v361
    %v363 = vpop.f32.mrb[0].mxu0
    %v364 = vadd.f32 %v270, %v363
    %v365 = vpop.f32.mrb[0].mxu0
    %366 = vmatprep.mubr.f32.mxu0 0.0
    %v367 = vand.u32 %v67, 4294901760
    %v368 = vsub.f32 %v67, %v367
    %369 = vmatmul.mubr.f32.gmra.mrb[0].mxu0 %v368
    %v370 = vpop.f32.mrb[0].mxu0
    %v371 = vadd.f32 %v276, %v370
    %v372 = vpop.f32.mrb[0].mxu0
    %373 = vdwg.mxu0
    %374 = vmatprep.subr.mxu0 0.0
    %v375 = vand.u32 %v54, 4294901760
    %376 = vmatpush1.msra.mxu0 %v375
    %377 = vmatprep.subr.mxu0 0.0
    %v378 = vand.u32 %v55, 4294901760
    %379 = vmatpush1.msra.mxu0 %v378
    %380 = vmatprep.subr.mxu0 0.0
    %v381 = vand.u32 %v56, 4294901760
    %382 = vmatpush1.msra.mxu0 %v381
    %383 = vmatprep.subr.mxu0 0.0
    %v384 = vand.u32 %v57, 4294901760
    %385 = vmatpush1.msra.mxu0 %v384
    %386 = vmatprep.subr.mxu0 0.0
    %v387 = vand.u32 %v58, 4294901760
    %388 = vmatpush1.msra.mxu0 %v387
    %389 = vmatprep.subr.mxu0 0.0
    %v390 = vand.u32 %v59, 4294901760
    %391 = vmatpush1.msra.mxu0 %v390
    %392 = vmatprep.subr.mxu0 0.0
    %v393 = vand.u32 %v60, 4294901760
    %394 = vmatpush1.msra.mxu0 %v393
    %395 = vmatprep.subr.mxu0 0.0
    %v396 = vand.u32 %v61, 4294901760
    %397 = vmatpush1.msra.mxu0 %v396
    %398 = vmatprep.subr.mxu0 0.0
    %399 = vmatpush1.msra.mxu0 0.0
    %400 = vmatprep.subr.mxu0 0.0
    %401 = vmatpush1.msra.mxu0 0.0
    %402 = vmatprep.subr.mxu0 0.0
    %403 = vmatpush1.msra.mxu0 0.0
    %404 = vmatprep.subr.mxu0 0.0
    %405 = vmatpush1.msra.mxu0 0.0
    %406 = vmatprep.subr.mxu0 0.0
    %407 = vmatpush1.msra.mxu0 0.0
    %408 = vmatprep.subr.mxu0 0.0
    %409 = vmatpush1.msra.mxu0 0.0
    %410 = vmatprep.subr.mxu0 0.0
    %411 = vmatpush1.msra.mxu0 0.0
    %412 = vmatprep.subr.mxu0 0.0
    %413 = vmatpush1.msra.mxu0 0.0
    %414 = vmatprep.subr.mxu0 0.0
    %415 = vmatpush1.msra.mxu0 0.0
    %416 = vmatprep.subr.mxu0 0.0
    %417 = vmatpush1.msra.mxu0 0.0
    %418 = vmatprep.subr.mxu0 0.0
    %419 = vmatpush1.msra.mxu0 0.0
    %420 = vmatprep.subr.mxu0 0.0
    %421 = vmatpush1.msra.mxu0 0.0
    %422 = vmatprep.subr.mxu0 0.0
    %423 = vmatpush1.msra.mxu0 0.0
    %424 = vmatprep.subr.mxu0 0.0
    %425 = vmatpush1.msra.mxu0 0.0
    %426 = vmatprep.subr.mxu0 0.0
    %427 = vmatpush1.msra.mxu0 0.0
    %428 = vmatprep.subr.mxu0 0.0
    %429 = vmatpush1.msra.mxu0 0.0
    %430 = vmatprep.subr.mxu0 0.0
    %431 = vmatpush1.msra.mxu0 0.0
    %432 = vmatprep.subr.mxu0 0.0
    %433 = vmatpush1.msra.mxu0 0.0
    %434 = vmatprep.subr.mxu0 0.0
    %435 = vmatpush1.msra.mxu0 0.0
    %436 = vmatprep.subr.mxu0 0.0
    %437 = vmatpush1.msra.mxu0 0.0
    %438 = vmatprep.subr.mxu0 0.0
    %439 = vmatpush1.msra.mxu0 0.0
    %440 = vmatprep.subr.mxu0 0.0
    %441 = vmatpush1.msra.mxu0 0.0
    %442 = vmatprep.subr.mxu0 0.0
    %443 = vmatpush1.msra.mxu0 0.0
    %444 = vmatprep.subr.mxu0 0.0
    %445 = vmatpush1.msra.mxu0 0.0
    %446 = vmatprep.mubr.f32.mxu0 0.0
    %v447 = vand.u32 %v64, 4294901760
    %v448 = vsub.f32 %v64, %v447
    %v449 = vand.u32 %v448, 4294901760
    %450 = vmatmul.mubr.f32.gmra.mrb[0].mxu0 %v449
    %v451 = vpop.f32.mrb[0].mxu0
    %v452 = vadd.f32 %v364, %v451
    %v453 = vpop.f32.mrb[0].mxu0
    %454 = vmatprep.mubr.f32.mxu0 0.0
    %v455 = vand.u32 %v67, 4294901760
    %v456 = vsub.f32 %v67, %v455
    %v457 = vand.u32 %v456, 4294901760
    %458 = vmatmul.mubr.f32.gmra.mrb[0].mxu0 %v457
    %v459 = vpop.f32.mrb[0].mxu0
    %v460 = vadd.f32 %v371, %v459
    %v461 = vpop.f32.mrb[0].mxu0
    %462 = vdwg.mxu0
    %463 = vmatprep.subr.mxu0 0.0
    %v464 = vand.u32 %v54, 4294901760
    %v465 = vsub.f32 %v54, %v464
    %v466 = vand.u32 %v465, 4294901760
    %467 = vmatpush1.msra.mxu0 %v466
    %468 = vmatprep.subr.mxu0 0.0
    %v469 = vand.u32 %v55, 4294901760
    %v470 = vsub.f32 %v55, %v469
    %v471 = vand.u32 %v470, 4294901760
    %472 = vmatpush1.msra.mxu0 %v471
    %473 = vmatprep.subr.mxu0 0.0
    %v474 = vand.u32 %v56, 4294901760
    %v475 = vsub.f32 %v56, %v474
    %v476 = vand.u32 %v475, 4294901760
    %477 = vmatpush1.msra.mxu0 %v476
    %478 = vmatprep.subr.mxu0 0.0
    %v479 = vand.u32 %v57, 4294901760
    %v480 = vsub.f32 %v57, %v479
    %v481 = vand.u32 %v480, 4294901760
    %482 = vmatpush1.msra.mxu0 %v481
    %483 = vmatprep.subr.mxu0 0.0
    %v484 = vand.u32 %v58, 4294901760
    %v485 = vsub.f32 %v58, %v484
    %v486 = vand.u32 %v485, 4294901760
    %487 = vmatpush1.msra.mxu0 %v486
    %488 = vmatprep.subr.mxu0 0.0
    %v489 = vand.u32 %v59, 4294901760
    %v490 = vsub.f32 %v59, %v489
    %v491 = vand.u32 %v490, 4294901760
    %492 = vmatpush1.msra.mxu0 %v491
    %493 = vmatprep.subr.mxu0 0.0
    %v494 = vand.u32 %v60, 4294901760
    %v495 = vsub.f32 %v60, %v494
    %v496 = vand.u32 %v495, 4294901760
    %497 = vmatpush1.msra.mxu0 %v496
    %498 = vmatprep.subr.mxu0 0.0
    %v499 = vand.u32 %v61, 4294901760
    %v500 = vsub.f32 %v61, %v499
    %v501 = vand.u32 %v500, 4294901760
    %502 = vmatpush1.msra.mxu0 %v501
    %503 = vmatprep.subr.mxu0 0.0
    %504 = vmatpush1.msra.mxu0 0.0
    %505 = vmatprep.subr.mxu0 0.0
    %506 = vmatpush1.msra.mxu0 0.0
    %507 = vmatprep.subr.mxu0 0.0
    %508 = vmatpush1.msra.mxu0 0.0
    %509 = vmatprep.subr.mxu0 0.0
    %510 = vmatpush1.msra.mxu0 0.0
    %511 = vmatprep.subr.mxu0 0.0
    %512 = vmatpush1.msra.mxu0 0.0
    %513 = vmatprep.subr.mxu0 0.0
    %514 = vmatpush1.msra.mxu0 0.0
    %515 = vmatprep.subr.mxu0 0.0
    %516 = vmatpush1.msra.mxu0 0.0
    %517 = vmatprep.subr.mxu0 0.0
    %518 = vmatpush1.msra.mxu0 0.0
    %519 = vmatprep.subr.mxu0 0.0
    %520 = vmatpush1.msra.mxu0 0.0
    %521 = vmatprep.subr.mxu0 0.0
    %522 = vmatpush1.msra.mxu0 0.0
    %523 = vmatprep.subr.mxu0 0.0
    %524 = vmatpush1.msra.mxu0 0.0
    %525 = vmatprep.subr.mxu0 0.0
    %526 = vmatpush1.msra.mxu0 0.0
    %527 = vmatprep.subr.mxu0 0.0
    %528 = vmatpush1.msra.mxu0 0.0
    %529 = vmatprep.subr.mxu0 0.0
    %530 = vmatpush1.msra.mxu0 0.0
    %531 = vmatprep.subr.mxu0 0.0
    %532 = vmatpush1.msra.mxu0 0.0
    %533 = vmatprep.subr.mxu0 0.0
    %534 = vmatpush1.msra.mxu0 0.0
    %535 = vmatprep.subr.mxu0 0.0
    %536 = vmatpush1.msra.mxu0 0.0
    %537 = vmatprep.subr.mxu0 0.0
    %538 = vmatpush1.msra.mxu0 0.0
    %539 = vmatprep.subr.mxu0 0.0
    %540 = vmatpush1.msra.mxu0 0.0
    %541 = vmatprep.subr.mxu0 0.0
    %542 = vmatpush1.msra.mxu0 0.0
    %543 = vmatprep.subr.mxu0 0.0
    %544 = vmatpush1.msra.mxu0 0.0
    %545 = vmatprep.subr.mxu0 0.0
    %546 = vmatpush1.msra.mxu0 0.0
    %547 = vmatprep.subr.mxu0 0.0
    %548 = vmatpush1.msra.mxu0 0.0
    %549 = vmatprep.subr.mxu0 0.0
    %550 = vmatpush1.msra.mxu0 0.0
    %551 = vmatprep.mubr.f32.mxu0 0.0
    %v552 = vand.u32 %v64, 4294901760
    %553 = vmatmul.mubr.f32.gmra.mrb[0].mxu0 %v552
    %v554 = vpop.f32.mrb[0].mxu0
    %v555 = vadd.f32 %v452, %v554
    %v556 = vpop.f32.mrb[0].mxu0
    %557 = vmatprep.mubr.f32.mxu0 0.0
    %v558 = vand.u32 %v67, 4294901760
    %559 = vmatmul.mubr.f32.gmra.mrb[0].mxu0 %v558
    %v560 = vpop.f32.mrb[0].mxu0
    %v561 = vadd.f32 %v460, %v560
    %v562 = vpop.f32.mrb[0].mxu0
    %563 = vdwg.mxu0
    %564 = vmatprep.subr.mxu0 0.0
    %v565 = vand.u32 %v54, 4294901760
    %566 = vmatpush1.msra.mxu0 %v565
    %567 = vmatprep.subr.mxu0 0.0
    %v568 = vand.u32 %v55, 4294901760
    %569 = vmatpush1.msra.mxu0 %v568
    %570 = vmatprep.subr.mxu0 0.0
    %v571 = vand.u32 %v56, 4294901760
    %572 = vmatpush1.msra.mxu0 %v571
    %573 = vmatprep.subr.mxu0 0.0
    %v574 = vand.u32 %v57, 4294901760
    %575 = vmatpush1.msra.mxu0 %v574
    %576 = vmatprep.subr.mxu0 0.0
    %v577 = vand.u32 %v58, 4294901760
    %578 = vmatpush1.msra.mxu0 %v577
    %579 = vmatprep.subr.mxu0 0.0
    %v580 = vand.u32 %v59, 4294901760
    %581 = vmatpush1.msra.mxu0 %v580
    %582 = vmatprep.subr.mxu0 0.0
    %v583 = vand.u32 %v60, 4294901760
    %584 = vmatpush1.msra.mxu0 %v583
    %585 = vmatprep.subr.mxu0 0.0
    %v586 = vand.u32 %v61, 4294901760
    %587 = vmatpush1.msra.mxu0 %v586
    %588 = vmatprep.subr.mxu0 0.0
    %589 = vmatpush1.msra.mxu0 0.0
    %590 = vmatprep.subr.mxu0 0.0
    %591 = vmatpush1.msra.mxu0 0.0
    %592 = vmatprep.subr.mxu0 0.0
    %593 = vmatpush1.msra.mxu0 0.0
    %594 = vmatprep.subr.mxu0 0.0
    %595 = vmatpush1.msra.mxu0 0.0
    %596 = vmatprep.subr.mxu0 0.0
    %597 = vmatpush1.msra.mxu0 0.0
    %598 = vmatprep.subr.mxu0 0.0
    %599 = vmatpush1.msra.mxu0 0.0
    %600 = vmatprep.subr.mxu0 0.0
    %601 = vmatpush1.msra.mxu0 0.0
    %602 = vmatprep.subr.mxu0 0.0
    %603 = vmatpush1.msra.mxu0 0.0
    %604 = vmatprep.subr.mxu0 0.0
    %605 = vmatpush1.msra.mxu0 0.0
    %606 = vmatprep.subr.mxu0 0.0
    %607 = vmatpush1.msra.mxu0 0.0
    %608 = vmatprep.subr.mxu0 0.0
    %609 = vmatpush1.msra.mxu0 0.0
    %610 = vmatprep.subr.mxu0 0.0
    %611 = vmatpush1.msra.mxu0 0.0
    %612 = vmatprep.subr.mxu0 0.0
    %613 = vmatpush1.msra.mxu0 0.0
    %614 = vmatprep.subr.mxu0 0.0
    %615 = vmatpush1.msra.mxu0 0.0
    %616 = vmatprep.subr.mxu0 0.0
    %617 = vmatpush1.msra.mxu0 0.0
    %618 = vmatprep.subr.mxu0 0.0
    %619 = vmatpush1.msra.mxu0 0.0
    %620 = vmatprep.subr.mxu0 0.0
    %621 = vmatpush1.msra.mxu0 0.0
    %622 = vmatprep.subr.mxu0 0.0
    %623 = vmatpush1.msra.mxu0 0.0
    %624 = vmatprep.subr.mxu0 0.0
    %625 = vmatpush1.msra.mxu0 0.0
    %626 = vmatprep.subr.mxu0 0.0
    %627 = vmatpush1.msra.mxu0 0.0
    %628 = vmatprep.subr.mxu0 0.0
    %629 = vmatpush1.msra.mxu0 0.0
    %630 = vmatprep.subr.mxu0 0.0
    %631 = vmatpush1.msra.mxu0 0.0
    %632 = vmatprep.subr.mxu0 0.0
    %633 = vmatpush1.msra.mxu0 0.0
    %634 = vmatprep.subr.mxu0 0.0
    %635 = vmatpush1.msra.mxu0 0.0
    %636 = vmatprep.mubr.f32.mxu0 0.0
    %v637 = vand.u32 %v64, 4294901760
    %638 = vmatmul.mubr.f32.gmra.mrb[0].mxu0 %v637
    %v639 = vpop.f32.mrb[0].mxu0
    %v640 = vadd.f32 %v555, %v639
    %v641 = vpop.f32.mrb[0].mxu0
    %642 = vmatprep.mubr.f32.mxu0 0.0
    %v643 = vand.u32 %v67, 4294901760
    %644 = vmatmul.mubr.f32.gmra.mrb[0].mxu0 %v643
    %v645 = vpop.f32.mrb[0].mxu0
    %v646 = vadd.f32 %v561, %v645
    %v647 = vpop.f32.mrb[0].mxu0
    %648 = vdwg.mxu0
    %v649 = vadd.f32 %v52, %v640
    %v650 = vadd.f32 %v53, %v646
    %651 = vst [vmem:[#allocation5] sm:$0xff] %v649
    %652 = vst [vmem:[#allocation5 + $0x8] sm:$0xff] %v650
    // Predicated region
    $region18: #{tpu_custom_call.1} parent=1 // pred_check
      _
    $region19: #{tpu_custom_call.1} parent=1 // pred_check_branch
      %654 = sbr.rel (0) target = $region21
    $region20: #{tpu_custom_call.1} parent=1 // pred_region
      %s656 = ssub.s32 256, 256
      %657 = vsyncadd [#allocation4], %s656
      %s658 = sshll.u32 [#allocation5], 4
      %s659 = int_to_ptr.vmem [resolvable:$true] %s658
      %664 = dma.vmem_to_hbm [thread:$0]  %s659, 256, %s2, [#allocation4], 128, 128, 8
    $region21: #{tpu_custom_call.1} parent=1 // pred_fallthru
      _
    // Predicated region
    $region22: #{tpu_custom_call.1} parent=1 // pred_check
      _
    $region23: #{tpu_custom_call.1} parent=1 // pred_check_branch
      %666 = sbr.rel (0) target = $region25
    $region24: #{tpu_custom_call.1} parent=1 // pred_region
      %667 = dma.done [#allocation4], 256
    $region25: #{tpu_custom_call.1} parent=1 // pred_fallthru
      _
    %668 = vsyncpa [#allocation3], 1
    %669 = vsyncpa [#allocation4], 1

</llo_original>
